<compile_context>
chip_gen: v7x
topology: tpu7x:2x2x1
jax: 0.10.0
libtpu: 0.0.40
codegen_flags: <defaults>
</compile_context>

<pallas_src>
import functools

import jax
import jax.numpy as jnp
from jax import lax
from jax.experimental import pallas as pl
from jax.experimental.pallas import tpu as pltpu

# ---- synthetic config (mirrors TMCfg.max_valence / NUM_ACT_BOND_TYPES) ----
MAX_VALENCE = 3
NUM_ACT_BOND_TYPES = 3
VOCAB = (MAX_VALENCE + 1) ** NUM_ACT_BOND_TYPES   # 64
EMBED_SIZE = 32

LANES = 128
SUBLANES = 8


def _valence_embed_kernel(idx_ref, table_ref, out_ref, *, vocab, pack):
    # idx_ref:   (TILE_G, PACK)            int32   (PACK packed atoms per output row)
    # table_ref: (PACK*VOCAB, PACK*E)      float32 (block-diagonal embedding table)
    # out_ref:   (TILE_G, PACK*E)          float   (lane-dense output)
    idx = idx_ref[...]                                              # (G, PACK) int32
    tile_g = out_ref.shape[0]

    # Column iota built once per invocation (hoisted by construction).
    col = lax.broadcasted_iota(jnp.int32, (tile_g, pack * vocab), 1)  # (G, PACK*VOCAB)

    # Block-sparse one-hot: row g has `pack` ones, one per disjoint vocab block,
    # at columns idx[g, j] + j*vocab.  Boolean OR accumulation, single cast.
    hit = col == idx[:, 0:1]
    for j in range(1, pack):                                        # static, tiny (PACK<=4)
        hit = hit | (col == (idx[:, j:j + 1] + j * vocab))
    onehot = hit.astype(jnp.float32)

    # Gather-as-matmul on the MXU: (G, PACK*VOCAB) @ (PACK*VOCAB, PACK*E).
    out_ref[...] = jnp.dot(onehot, table_ref[...],
                           preferred_element_type=jnp.float32).astype(out_ref.dtype)


def valence_embedding(valences, embed_table, *, tile_rows=8192):
    """valences: (B, A, V) int-like; embed_table: (VOCAB, E) float -> (B, A, E)."""
    B, A, V = valences.shape
    vocab, E = embed_table.shape
    N = B * A
    out_dtype = embed_table.dtype

    # Exact integer index (replaces float einsum + .long(); bit-identical for
    # in-range valences and exact even for large vocabularies).
    mult = jnp.array([(MAX_VALENCE + 1) ** i for i in range(V)], dtype=jnp.int32)
    idx_flat = jnp.sum(valences.astype(jnp.int32) * mult, axis=-1).reshape(N)   # (N,)

    # Lane-dense packing factor: PACK atoms share one 128-lane output row.
    pack = LANES // E if (E <= LANES and LANES % E == 0) else 1

    # Rows per grid step: multiple of pack*8 so the packed output tile keeps
    # 8-sublane alignment; big enough to amortize per-step overhead, well under
    # scoped VMEM even on v7x (64 MiB physical).
    row_align = pack * SUBLANES
    if N <= tile_rows:
        tile_n = pl.cdiv(N, row_align) * row_align
    else:
        tile_n = max(row_align, (tile_rows // row_align) * row_align)
    n_pad = pl.cdiv(N, tile_n) * tile_n
    grid = (n_pad // tile_n,)
    tile_g = tile_n // pack

    # Pad with index 0 (valid row, result discarded after the kernel).
    if n_pad != N:
        idx_flat = jnp.zeros((n_pad,), jnp.int32).at[:N].set(idx_flat)
    idx2d = idx_flat.reshape(n_pad // pack, pack)                    # (N_pad/PACK, PACK)

    # Block-diagonal table: (PACK*VOCAB, PACK*E) -- tiny, stays VMEM-resident.
    table_bd = jnp.kron(jnp.eye(pack, dtype=jnp.float32),
                        embed_table.astype(jnp.float32))

    kernel = functools.partial(_valence_embed_kernel, vocab=vocab, pack=pack)

    out_packed = pl.pallas_call(
        kernel,
        out_shape=jax.ShapeDtypeStruct((n_pad // pack, pack * E), out_dtype),
        grid=grid,
        in_specs=[
            pl.BlockSpec((tile_g, pack), lambda i: (i, 0)),              # indices
            pl.BlockSpec((pack * vocab, pack * E), lambda i: (0, 0)),    # table (resident)
        ],
        out_specs=pl.BlockSpec((tile_g, pack * E), lambda i: (i, 0)),
        compiler_params=pltpu.CompilerParams(
            dimension_semantics=("parallel",),          # megacore split on v7x
            vmem_limit_bytes=32 * 1024 * 1024,          # safe on v5e/v6e/v7x
        ),
    )(idx2d, table_bd)

    # (N_pad/PACK, PACK*E) -> (N_pad, E) is a free row-major reinterpretation.
    out = out_packed.reshape(n_pad, E)[:N]
    return out.reshape(B, A, E)


def _reference(valences, embed_table):
    mult = jnp.array([(MAX_VALENCE + 1) ** i for i in range(valences.shape[-1])],
                     dtype=jnp.float32)
    to_embed = jnp.einsum('bav,v->ba', valences.astype(jnp.float32), mult).astype(jnp.int32)
    return embed_table[to_embed]


if __name__ == "__main__":
    key = jax.random.PRNGKey(0)
    k_val, k_tab = jax.random.split(key)

    B, A = 2, 8   # batch, atoms
    valences = jax.random.randint(k_val, (B, A, NUM_ACT_BOND_TYPES),
                                  0, MAX_VALENCE + 1, dtype=jnp.int32)
    # deterministic synthetic embedding weights (nn.Embedding default ~ N(0,1))
    embed_table = jax.random.normal(k_tab, (VOCAB, EMBED_SIZE), dtype=jnp.float32)

    out = valence_embedding(valences, embed_table)
    jax.block_until_ready(out)

    ref = _reference(valences, embed_table)
    assert out.shape == (B, A, EMBED_SIZE), out.shape
    assert jnp.allclose(out, ref, atol=1e-5), "mismatch vs reference"
    print("KERNEL_OK")
</pallas_src>

<mosaic_0001>
module attributes {stable_mosaic.version = 11 : i64} {
  func.func @_valence_embed_kernel(%arg0: i32, %arg1: memref<8x4xi32, #tpu.memory_space<vmem>>, %arg2: memref<256x128xf32, #tpu.memory_space<vmem>>, %arg3: memref<8x128xf32, #tpu.memory_space<vmem>>) attributes {dimension_semantics = [#tpu.dimension_semantics<parallel>], iteration_bounds = array<i64: 1>, scalar_prefetch = 0 : i64, scratch_operands = 0 : i64, tpu.core_type = #tpu.core_type<tc>, window_params = [{transform_indices = @transform_0, window_bounds = array<i64: 8, 4>}, {pipeline_mode = #tpu.pipeline_mode<synchronous>, transform_indices = @transform_1, window_bounds = array<i64: 256, 128>}, {transform_indices = @transform_2, window_bounds = array<i64: 8, 128>}]} {
    %c0 = arith.constant 0 : index
    %c0_0 = arith.constant 0 : index
    %0 = vector.load %arg1[%c0, %c0_0] : memref<8x4xi32, #tpu.memory_space<vmem>>, vector<8x4xi32>
    %1 = tpu.iota {dimensions = array<i32: 1>} : vector<8x256xi32>
    %2 = vector.extract_strided_slice %0 {offsets = [0, 0], sizes = [8, 1], strides = [1, 1]} : vector<8x4xi32> to vector<8x1xi32>
    %3 = vector.broadcast %2 : vector<8x1xi32> to vector<8x256xi32>
    %4 = arith.cmpi eq, %1, %3 : vector<8x256xi32>
    %5 = vector.extract_strided_slice %0 {offsets = [0, 1], sizes = [8, 1], strides = [1, 1]} : vector<8x4xi32> to vector<8x1xi32>
    %c64_i32 = arith.constant 64 : i32
    %6 = vector.broadcast %c64_i32 : i32 to vector<8x1xi32>
    %7 = arith.addi %5, %6 : vector<8x1xi32>
    %8 = vector.broadcast %7 : vector<8x1xi32> to vector<8x256xi32>
    %9 = arith.cmpi eq, %1, %8 : vector<8x256xi32>
    %10 = arith.ori %4, %9 : vector<8x256xi1>
    %11 = vector.extract_strided_slice %0 {offsets = [0, 2], sizes = [8, 1], strides = [1, 1]} : vector<8x4xi32> to vector<8x1xi32>
    %c128_i32 = arith.constant 128 : i32
    %12 = vector.broadcast %c128_i32 : i32 to vector<8x1xi32>
    %13 = arith.addi %11, %12 : vector<8x1xi32>
    %14 = vector.broadcast %13 : vector<8x1xi32> to vector<8x256xi32>
    %15 = arith.cmpi eq, %1, %14 : vector<8x256xi32>
    %16 = arith.ori %10, %15 : vector<8x256xi1>
    %17 = vector.extract_strided_slice %0 {offsets = [0, 3], sizes = [8, 1], strides = [1, 1]} : vector<8x4xi32> to vector<8x1xi32>
    %c192_i32 = arith.constant 192 : i32
    %18 = vector.broadcast %c192_i32 : i32 to vector<8x1xi32>
    %19 = arith.addi %17, %18 : vector<8x1xi32>
    %20 = vector.broadcast %19 : vector<8x1xi32> to vector<8x256xi32>
    %21 = arith.cmpi eq, %1, %20 : vector<8x256xi32>
    %22 = arith.ori %16, %21 : vector<8x256xi1>
    %23 = arith.extui %22 : vector<8x256xi1> to vector<8x256xi32>
    %24 = arith.sitofp %23 : vector<8x256xi32> to vector<8x256xf32>
    %c0_1 = arith.constant 0 : index
    %c0_2 = arith.constant 0 : index
    %25 = vector.load %arg2[%c0_1, %c0_2] : memref<256x128xf32, #tpu.memory_space<vmem>>, vector<256x128xf32>
    %cst = arith.constant dense<0.000000e+00> : vector<8x128xf32>
    %26 = tpu.matmul %24, %25, %cst {dimension_numbers = #tpu.dot_dimension_numbers<[1], [0], [0], [1], [0, 0, 1, 1], [], []>} : vector<8x256xf32>, vector<256x128xf32>, vector<8x128xf32> -> vector<8x128xf32>
    %c0_3 = arith.constant 0 : index
    %c0_4 = arith.constant 0 : index
    %27 = vector.load %arg3[%c0_3, %c0_4] : memref<8x128xf32, #tpu.memory_space<vmem>>, vector<8x128xf32>
    tpu.vector_store %arg3[%c0_3, %c0_4], %26 {strides = array<i32>} : memref<8x128xf32, #tpu.memory_space<vmem>>, vector<8x128xf32>,
    return
  }
  func.func @transform_0(%arg0: i32) -> (i32, i32) {
    %c0_i32 = arith.constant 0 : i32
    %c0_i32_0 = arith.constant 0 : i32
    return %arg0, %c0_i32 : i32, i32
  }
  func.func @transform_1(%arg0: i32) -> (i32, i32) {
    %c0_i32 = arith.constant 0 : i32
    %c0_i32_0 = arith.constant 0 : i32
    %c0_i32_1 = arith.constant 0 : i32
    return %c0_i32, %c0_i32_0 : i32, i32
  }
  func.func @transform_2(%arg0: i32) -> (i32, i32) {
    %c0_i32 = arith.constant 0 : i32
    %c0_i32_0 = arith.constant 0 : i32
    return %arg0, %c0_i32 : i32, i32
  }
}

</mosaic_0001>

<llo_original>
// kernel: tpu_custom_call.1
$region0: #{tpu_custom_call.1}
  #allocation0 [shape = 'u32[]', space=smem, size = 0x4, offset = 0x4, fixed_abs, tag = 'smem constant byte address 0x4 - core index']
  #allocation1 [shape = 'u32[144,128]{1,0:T(1,128)}', space=vmem, size = 0x12000, scoped, tag = 'internal scratch']
  %s0 = inlined_call_operand.vmem [shape: s32[8,4], index: 0, kind: input, shape index: {}]
  %s1 = inlined_call_operand.hbm [shape: f32[256,128], index: 1, kind: input, shape index: {}]
  %s2 = inlined_call_operand.hbm [shape: f32[8,128], index: 2, kind: output, shape index: {}]
  %s3 = sld [smem:[#allocation0]]
  $region22: #{tpu_custom_call.1} parent=0
    _
  %s5 = ssub.s32 1, %s3
  %s6 = scalar_select 0, %s5, %s3
  $region1: #{tpu_custom_call.1} parent=0
    #allocation2 [shape = 'u8[131072]{0}', space=vmem, size = 0x20000, scoped, tag = 'input window, operand 1, single buffered']
    #allocation3 [shape = 's32[1]{0}', space=sflag, size = 0x4, scoped, tag = 'scoped memory for tpu_custom_call.1']
    #allocation4 [shape = 's32[1]{0}', space=sflag, size = 0x4, scoped, tag = 'scoped memory for tpu_custom_call.1']
    #allocation5 [shape = 'u8[4096]{0}', space=vmem, size = 0x1000, scoped, tag = 'output window, operand 0, single buffered']
    %7 = vsyncpa [#allocation3], 0
    %8 = vsyncpa [#allocation4], 0
    // Predicated region
    $region2: #{tpu_custom_call.1} parent=1 // pred_check
      _
    $region3: #{tpu_custom_call.1} parent=1 // pred_check_branch
      %10 = sbr.rel (0) target = $region5
    $region4: #{tpu_custom_call.1} parent=1 // pred_region
      _
    $region5: #{tpu_custom_call.1} parent=1 // pred_fallthru
      _
    // Predicated region
    $region6: #{tpu_custom_call.1} parent=1 // pred_check
      _
    $region7: #{tpu_custom_call.1} parent=1 // pred_check_branch
      %12 = sbr.rel (0) target = $region9
    $region8: #{tpu_custom_call.1} parent=1 // pred_region
      %s14 = ssub.s32 4096, 4096
      %15 = vsyncadd [#allocation3], %s14
      %s16 = sshll.u32 [#allocation2], 4
      %s17 = int_to_ptr.vmem [resolvable:$true] %s16
      %22 = dma.hbm_to_vmem [thread:$0]  %s1, 4096, %s17, [#allocation3], 128, 128, 8
    $region9: #{tpu_custom_call.1} parent=1 // pred_fallthru
      _
    // Predicated region
    $region10: #{tpu_custom_call.1} parent=1 // pred_check
      _
    $region11: #{tpu_custom_call.1} parent=1 // pred_check_branch
      %24 = sbr.rel (0) target = $region13
    $region12: #{tpu_custom_call.1} parent=1 // pred_region
      %25 = dma.done [#allocation3], 4096
    $region13: #{tpu_custom_call.1} parent=1 // pred_fallthru
      _
    %v26 = vld [vmem:[%s0] sm:$0xff]
    %v27 = vlaneseq
    %v28 = vand.u32 %v27, 127
    %v29 = vadd.s32 %v28, 128
    %30 = vset.pattern.permute.xlu0 0
    %31 = vperm.xlu0 %30, %v26
    %v32 = vpop.permute.xlu0 %31
    %vm33 = vcmp.eq.s32.totalorder %v28, %v32
    %vm34 = vcmp.eq.s32.totalorder %v29, %v32
    %v35 = vadd.s32 %v26, 64
    %36 = vset.pattern.permute.xlu0 1
    %37 = vperm.xlu0 %36, %v35
    %v38 = vpop.permute.xlu0 %37
    %vm39 = vcmp.eq.s32.totalorder %v28, %v38
    %vm40 = vcmp.eq.s32.totalorder %v29, %v38
    %vm41 = vmor %vm33, %vm39
    %vm42 = vmor %vm34, %vm40
    %v43 = vadd.s32 %v26, 128
    %44 = vset.pattern.permute.xlu0 2
    %45 = vperm.xlu0 %44, %v43
    %v46 = vpop.permute.xlu0 %45
    %vm47 = vcmp.eq.s32.totalorder %v28, %v46
    %vm48 = vcmp.eq.s32.totalorder %v29, %v46
    %vm49 = vmor %vm41, %vm47
    %vm50 = vmor %vm42, %vm48
    %v51 = vadd.s32 %v26, 192
    %52 = vset.pattern.permute.xlu0 3
    %53 = vperm.xlu0 %52, %v51
    %v54 = vpop.permute.xlu0 %53
    %vm55 = vcmp.eq.s32.totalorder %v28, %v54
    %vm56 = vcmp.eq.s32.totalorder %v29, %v54
    %vm57 = vmor %vm49, %vm55
    %vm58 = vmor %vm50, %vm56
    %v59 = vsel %vm57, 1, 0
    %v60 = vsel %vm58, 1, 0
    %v61 = vcvt.s32.f32 %v59
    %v62 = vcvt.s32.f32 %v60
    %v63 = vld [vmem:[#allocation2] sm:$0xff]
    %v64 = vld [vmem:[#allocation2 + $0x8] sm:$0xff]
    %v65 = vld [vmem:[#allocation2 + $0x10] sm:$0xff]
    %v66 = vld [vmem:[#allocation2 + $0x18] sm:$0xff]
    %v67 = vld [vmem:[#allocation2 + $0x20] sm:$0xff]
    %v68 = vld [vmem:[#allocation2 + $0x28] sm:$0xff]
    %v69 = vld [vmem:[#allocation2 + $0x30] sm:$0xff]
    %v70 = vld [vmem:[#allocation2 + $0x38] sm:$0xff]
    %v71 = vld [vmem:[#allocation2 + $0x40] sm:$0xff]
    %v72 = vld [vmem:[#allocation2 + $0x48] sm:$0xff]
    %v73 = vld [vmem:[#allocation2 + $0x50] sm:$0xff]
    %v74 = vld [vmem:[#allocation2 + $0x58] sm:$0xff]
    %v75 = vld [vmem:[#allocation2 + $0x60] sm:$0xff]
    %v76 = vld [vmem:[#allocation2 + $0x68] sm:$0xff]
    %v77 = vld [vmem:[#allocation2 + $0x70] sm:$0xff]
    %v78 = vld [vmem:[#allocation2 + $0x78] sm:$0xff]
    %v79 = vld [vmem:[#allocation2 + $0x80] sm:$0xff]
    %v80 = vld [vmem:[#allocation2 + $0x88] sm:$0xff]
    %v81 = vld [vmem:[#allocation2 + $0x90] sm:$0xff]
    %v82 = vld [vmem:[#allocation2 + $0x98] sm:$0xff]
    %v83 = vld [vmem:[#allocation2 + $0xa0] sm:$0xff]
    %v84 = vld [vmem:[#allocation2 + $0xa8] sm:$0xff]
    %v85 = vld [vmem:[#allocation2 + $0xb0] sm:$0xff]
    %v86 = vld [vmem:[#allocation2 + $0xb8] sm:$0xff]
    %v87 = vld [vmem:[#allocation2 + $0xc0] sm:$0xff]
    %v88 = vld [vmem:[#allocation2 + $0xc8] sm:$0xff]
    %v89 = vld [vmem:[#allocation2 + $0xd0] sm:$0xff]
    %v90 = vld [vmem:[#allocation2 + $0xd8] sm:$0xff]
    %v91 = vld [vmem:[#allocation2 + $0xe0] sm:$0xff]
    %v92 = vld [vmem:[#allocation2 + $0xe8] sm:$0xff]
    %v93 = vld [vmem:[#allocation2 + $0xf0] sm:$0xff]
    %v94 = vld [vmem:[#allocation2 + $0xf8] sm:$0xff]
    %95 = vmatprep.subr.mxu0 0.0
    %96 = vmatpush1.msra.mxu0 %v63
    %97 = vmatprep.subr.mxu0 0.0
    %98 = vmatpush1.msra.mxu0 %v64
    %99 = vmatprep.subr.mxu0 0.0
    %100 = vmatpush1.msra.mxu0 %v65
    %101 = vmatprep.subr.mxu0 0.0
    %102 = vmatpush1.msra.mxu0 %v66
    %103 = vmatprep.subr.mxu0 0.0
    %104 = vmatpush1.msra.mxu0 %v67
    %105 = vmatprep.subr.mxu0 0.0
    %106 = vmatpush1.msra.mxu0 %v68
    %107 = vmatprep.subr.mxu0 0.0
    %108 = vmatpush1.msra.mxu0 %v69
    %109 = vmatprep.subr.mxu0 0.0
    %110 = vmatpush1.msra.mxu0 %v70
    %111 = vmatprep.subr.mxu0 0.0
    %112 = vmatpush1.msra.mxu0 %v71
    %113 = vmatprep.subr.mxu0 0.0
    %114 = vmatpush1.msra.mxu0 %v72
    %115 = vmatprep.subr.mxu0 0.0
    %116 = vmatpush1.msra.mxu0 %v73
    %117 = vmatprep.subr.mxu0 0.0
    %118 = vmatpush1.msra.mxu0 %v74
    %119 = vmatprep.subr.mxu0 0.0
    %120 = vmatpush1.msra.mxu0 %v75
    %121 = vmatprep.subr.mxu0 0.0
    %122 = vmatpush1.msra.mxu0 %v76
    %123 = vmatprep.subr.mxu0 0.0
    %124 = vmatpush1.msra.mxu0 %v77
    %125 = vmatprep.subr.mxu0 0.0
    %126 = vmatpush1.msra.mxu0 %v78
    %127 = vmatprep.subr.mxu0 0.0
    %128 = vmatpush1.msra.mxu0 %v79
    %129 = vmatprep.subr.mxu0 0.0
    %130 = vmatpush1.msra.mxu0 %v80
    %131 = vmatprep.subr.mxu0 0.0
    %132 = vmatpush1.msra.mxu0 %v81
    %133 = vmatprep.subr.mxu0 0.0
    %134 = vmatpush1.msra.mxu0 %v82
    %135 = vmatprep.subr.mxu0 0.0
    %136 = vmatpush1.msra.mxu0 %v83
    %137 = vmatprep.subr.mxu0 0.0
    %138 = vmatpush1.msra.mxu0 %v84
    %139 = vmatprep.subr.mxu0 0.0
    %140 = vmatpush1.msra.mxu0 %v85
    %141 = vmatprep.subr.mxu0 0.0
    %142 = vmatpush1.msra.mxu0 %v86
    %143 = vmatprep.subr.mxu0 0.0
    %144 = vmatpush1.msra.mxu0 %v87
    %145 = vmatprep.subr.mxu0 0.0
    %146 = vmatpush1.msra.mxu0 %v88
    %147 = vmatprep.subr.mxu0 0.0
    %148 = vmatpush1.msra.mxu0 %v89
    %149 = vmatprep.subr.mxu0 0.0
    %150 = vmatpush1.msra.mxu0 %v90
    %151 = vmatprep.subr.mxu0 0.0
    %152 = vmatpush1.msra.mxu0 %v91
    %153 = vmatprep.subr.mxu0 0.0
    %154 = vmatpush1.msra.mxu0 %v92
    %155 = vmatprep.subr.mxu0 0.0
    %156 = vmatpush1.msra.mxu0 %v93
    %157 = vmatprep.subr.mxu0 0.0
    %158 = vmatpush1.msra.mxu0 %v94
    %159 = vmatprep.mubr.f32.mxu0 %v62
    %160 = vmatmul.mubr.f32.gmra.mrb[0].mxu0 %v61
    %v161 = vpop.f32.mrb[0].mxu0
    %v162 = vadd.f32 0.0, %v161
    %v163 = vpop.f32.mrb[0].mxu0
    %164 = vdwg.mxu0
    %165 = vst [vmem:[#allocation5] sm:$0xff] %v162
    // Predicated region
    $region14: #{tpu_custom_call.1} parent=1 // pred_check
      _
    $region15: #{tpu_custom_call.1} parent=1 // pred_check_branch
      %167 = sbr.rel (0) target = $region17
    $region16: #{tpu_custom_call.1} parent=1 // pred_region
      %s169 = ssub.s32 128, 128
      %170 = vsyncadd [#allocation4], %s169
      %s172 = sshll.u32 [#allocation5], 4
      %s173 = int_to_ptr.vmem [resolvable:$true] %s172
      %175 = dma.vmem_to_hbm [thread:$0]  %s173, 128, %s2, [#allocation4]
    $region17: #{tpu_custom_call.1} parent=1 // pred_fallthru
      _
    // Predicated region
    $region18: #{tpu_custom_call.1} parent=1 // pred_check
      _
    $region19: #{tpu_custom_call.1} parent=1 // pred_check_branch
      %177 = sbr.rel (0) target = $region21
    $region20: #{tpu_custom_call.1} parent=1 // pred_region
      %178 = dma.done [#allocation4], 128
    $region21: #{tpu_custom_call.1} parent=1 // pred_fallthru
      _
    %179 = vsyncpa [#allocation3], 1
    %180 = vsyncpa [#allocation4], 1

</llo_original>
